<compile_context>
chip_gen: v5e
topology: v5e:2x2
jax: 0.10.0
libtpu: 0.0.40
codegen_flags: <defaults>
</compile_context>

<pallas_src>
import functools
import math

import jax
import jax.numpy as jnp
import numpy as np
from jax.experimental import pallas as pl
from jax.experimental.pallas import tpu as pltpu


def moral_ground_kernel(mg_ref, situ_ref,
                        wqv_ref, bqv_ref, wk_ref, bk_ref, wo_ref, bo_ref,
                        hmask_ref, hmask_t_ref,
                        wpre1_ref, wpre2_ref, bpre_ref,
                        wclf_ref, bclf_ref,
                        pred_ref, *, d_grounds):
    f32 = jnp.float32
    bf16 = jnp.bfloat16

    G = d_grounds
    GTB, D = mg_ref.shape          # g-major block: rows [g*TB + t]
    TB = GTB // G
    h = hmask_ref.shape[1]

    situ = situ_ref[...]                                                    # (TB, D) bf16

    # key projection: one situation row per sample -> (TB, D) f32
    k = jnp.dot(situ, wk_ref[...], preferred_element_type=f32) + bk_ref[...]

    # fused Q|V projection for ALL ground rows at once: (G*TB, D) @ (D, 2D)
    qv = (jnp.dot(mg_ref[...], wqv_ref[...], preferred_element_type=f32)
          + bqv_ref[...])                                                   # (G*TB, 2D) f32
    q = qv[:, :D]
    v = qv[:, D:]

    # per-head scores: sum over the d_k lanes of each head of q*k, via the
    # one-hot head-membership mask.  k is broadcast over the G ground rows.
    qk = (q.reshape(G, TB, D) * k[None, :, :]).reshape(GTB, D).astype(bf16)
    s = jnp.dot(qk, hmask_ref[...], preferred_element_type=f32)             # (G*TB, h)

    # softmax over the G ground rows, per (sample, head) -- f32 VPU math
    s3 = s.reshape(G, TB, h)
    m = jnp.max(s3, axis=0)                                                 # (TB, h)
    e3 = jnp.exp(s3 - m[None, :, :])
    denom = jnp.sum(e3, axis=0)                                             # (TB, h)
    inv = pl.reciprocal(denom, approx=True)                                 # EUP slot (hot path)
    p3 = e3 * inv[None, :, :]                                               # (G, TB, h)

    # broadcast p back onto the d_k lanes of each head, weight v, sum over grounds
    p_flat = p3.reshape(GTB, h).astype(bf16)
    p_full = jnp.dot(p_flat, hmask_t_ref[...], preferred_element_type=f32)  # (G*TB, D)
    x_sum = jnp.sum((p_full * v).reshape(G, TB, D), axis=0)                 # (TB, D) f32

    # output projection folded with the sum over ground rows:
    #   attn_results.sum(-2) == (sum_g x_g) @ Wo + G * bo
    weighted = (jnp.dot(x_sum.astype(bf16), wo_ref[...], preferred_element_type=f32)
                + G * bo_ref[...])                                          # (TB, D)

    # pre_classifier(cat(weighted, situation)) with the (2D, D) weight split in two
    logits = (jnp.dot(weighted.astype(bf16), wpre1_ref[...], preferred_element_type=f32)
              + jnp.dot(situ, wpre2_ref[...], preferred_element_type=f32)
              + bpre_ref[...])                                              # (TB, D)
    logits = jnp.maximum(logits, 0.0)          # ReLU (+ identity eval-mode dropout)

    clf = (jnp.dot(logits.astype(bf16), wclf_ref[...], preferred_element_type=f32)
           + bclf_ref[...])                                                 # (TB, n_classes)
    cm = jnp.max(clf, axis=-1, keepdims=True)
    ce = jnp.exp(clf - cm)
    # exact divide on the tiny (TB, n_classes) output so probabilities sum to 1
    pred_ref[...] = ce / jnp.sum(ce, axis=-1, keepdims=True)


def _default_vmem_limit():
    """Per-generation VMEM limit: physical capacity minus ~16 MiB headroom
    (~112 MiB on v5e/v6e's 128 MiB, ~48 MiB on v7x's 64 MiB)."""
    mib = 1024 * 1024
    try:
        cap = int(pltpu.get_tpu_info().vmem_capacity_bytes)
    except Exception:
        cap = 64 * mib
    return int(min(max(32 * mib, cap - 16 * mib), 112 * mib))


def moral_ground_forward(mg_matrix, situation, params, *, tb=256):
    """mg_matrix (B, d_grounds, D) f32, situation (B, D) f32 -> pred (B, n_classes) f32.

    tb = samples per grid step (multiple of 8).  Production: 128 (v5e) / 256 (v6e, v7x).
    """
    B, G, D = mg_matrix.shape
    n_classes = params["wclf"].shape[1]

    # tb must be a multiple of 8; keep >= 2 grid steps when the batch allows
    # (megacore sharding of the batch grid on v7x's 2 TensorCores).
    tb = max(8, (tb // 8) * 8)
    while tb > 8 and pl.cdiv(B, tb) < 2:
        tb //= 2
    tb = max(8, (tb // 8) * 8)

    nb = pl.cdiv(B, tb)
    Bp = nb * tb
    if Bp != B:
        mg_matrix = jnp.pad(mg_matrix, ((0, Bp - B), (0, 0), (0, 0)))
        situation = jnp.pad(situation, ((0, Bp - B), (0, 0)))

    # Layout plumbing in the wrapper: each batch block is presented as one dense
    # g-major (G*tb, D) slab so the kernel needs no reshapes of bf16 inputs and
    # every matmul runs with M = G*tb rows on the MXU.
    mg_blocked = (mg_matrix.reshape(nb, tb, G, D)
                  .transpose(0, 2, 1, 3)
                  .reshape(nb * G * tb, D)
                  .astype(jnp.bfloat16))
    situ_b = situation.astype(jnp.bfloat16)

    def wspec(a):   # grid-invariant weight / bias / mask: single-buffered
        return pl.BlockSpec(a.shape, lambda b: (0, 0), pipeline_mode=pl.Buffered(1))

    in_specs = [
        pl.BlockSpec((G * tb, D), lambda b: (b, 0)),     # moral-ground rows (g-major slab)
        pl.BlockSpec((tb, D), lambda b: (b, 0)),         # situation
        wspec(params["wqv"]), wspec(params["bqv"]),
        wspec(params["wk"]), wspec(params["bk"]),
        wspec(params["wo"]), wspec(params["bo"]),
        wspec(params["head_mask"]), wspec(params["head_mask_t"]),
        wspec(params["wpre1"]), wspec(params["wpre2"]), wspec(params["bpre"]),
        wspec(params["wclf"]), wspec(params["bclf"]),
    ]
    out_spec = pl.BlockSpec((tb, n_classes), lambda b: (b, 0))

    pred = pl.pallas_call(
        functools.partial(moral_ground_kernel, d_grounds=G),
        grid=(nb,),
        in_specs=in_specs,
        out_specs=out_spec,
        out_shape=jax.ShapeDtypeStruct((Bp, n_classes), jnp.float32),
        compiler_params=pltpu.CompilerParams(
            dimension_semantics=("parallel",),           # megacore-shards the batch grid
            vmem_limit_bytes=_default_vmem_limit(),
        ),
    )(mg_blocked, situ_b,
      params["wqv"], params["bqv"], params["wk"], params["bk"],
      params["wo"], params["bo"],
      params["head_mask"], params["head_mask_t"],
      params["wpre1"], params["wpre2"], params["bpre"],
      params["wclf"], params["bclf"])
    return pred[:B]


def reference_forward(mg_matrix, situation, params, h):
    """Pure-JAX replica of the torch forward (eval mode), following the torch
    reshape/transpose structure, on the same bf16-quantized weights/inputs the
    kernel consumes (math in f32)."""
    f32 = jnp.float32
    B, G, D = mg_matrix.shape
    dk = D // h

    mg = mg_matrix.astype(jnp.bfloat16).astype(f32)
    situ = situation.astype(jnp.bfloat16).astype(f32)
    wqv = params["wqv"].astype(f32)
    wq, wv = wqv[:, :D], wqv[:, D:]
    bq, bv = params["bqv"][:, :D], params["bqv"][:, D:]
    wk = params["wk"].astype(f32)
    wo = params["wo"].astype(f32)
    wpre = jnp.concatenate([params["wpre1"], params["wpre2"]], axis=0).astype(f32)
    wclf = params["wclf"].astype(f32)

    q = mg @ wq + bq[0]                                     # (B, G, D)
    k = situ[:, None, :] @ wk + params["bk"][0]             # (B, 1, D)
    v = mg @ wv + bv[0]                                     # (B, G, D)
    qh = q.reshape(B, G, h, dk).transpose(0, 2, 1, 3)       # (B, h, G, dk)
    kh = k.reshape(B, 1, h, dk).transpose(0, 2, 1, 3)       # (B, h, 1, dk)
    vh = v.reshape(B, G, h, dk).transpose(0, 2, 1, 3)       # (B, h, G, dk)
    scores = jnp.einsum("bhgd,bhjd->bhgj", qh, kh).sum(-1)  # (B, h, G)
    p = jax.nn.softmax(scores, axis=-1)[..., None]          # (B, h, G, 1)
    x = (p * vh).transpose(0, 2, 1, 3).reshape(B, G, D)
    attn_out = x @ wo + params["bo"][0]                     # (B, G, D)
    weighted = attn_out.sum(-2)                             # (B, D)
    logits = jnp.concatenate([weighted, situ], axis=1) @ wpre + params["bpre"][0]
    logits = jax.nn.relu(logits)
    clf = logits @ wclf + params["bclf"][0]
    return jax.nn.softmax(clf, axis=-1)


def init_params(key, d_model, h, n_classes):
    assert d_model % h == 0, "d_model must be divisible by the number of heads"

    def linear(k, fan_in, fan_out):
        kw, kb = jax.random.split(k)
        bound = 1.0 / math.sqrt(fan_in)
        W = jax.random.uniform(kw, (fan_in, fan_out), jnp.float32, -bound, bound)
        b = jax.random.uniform(kb, (1, fan_out), jnp.float32, -bound, bound)
        return W, b

    ks = jax.random.split(key, 6)
    wq, bq = linear(ks[0], d_model, d_model)
    wk, bk = linear(ks[1], d_model, d_model)
    wv, bv = linear(ks[2], d_model, d_model)
    wo, bo = linear(ks[3], d_model, d_model)
    wpre, bpre = linear(ks[4], 2 * d_model, d_model)
    wclf, bclf = linear(ks[5], d_model, n_classes)

    dk = d_model // h
    head_ids = jnp.arange(d_model) // dk
    head_mask = (head_ids[:, None] == jnp.arange(h)[None, :]).astype(jnp.float32)

    bf16 = jnp.bfloat16
    return dict(
        # fused Q|V projection (both consume the moral-ground rows)
        wqv=jnp.concatenate([wq, wv], axis=1).astype(bf16),
        bqv=jnp.concatenate([bq, bv], axis=1),               # biases stay f32
        wk=wk.astype(bf16), bk=bk,
        wo=wo.astype(bf16), bo=bo,
        head_mask=head_mask.astype(bf16),                    # 0/1 masks, exact in bf16
        head_mask_t=head_mask.T.astype(bf16),
        wpre1=wpre[:d_model].astype(bf16),
        wpre2=wpre[d_model:].astype(bf16),
        bpre=bpre,
        wclf=wclf.astype(bf16), bclf=bclf,
    )


if __name__ == "__main__":
    # small shapes consistent with the module defaults
    B = 10           # nbatches (not a multiple of TB -> exercises the pad path)
    h = 4            # heads
    d_model = 32
    d_grounds = 6
    n_classes = 2
    TB = 8           # samples per grid step (production: 128 on v5e, 256 on v6e/v7x)

    key = jax.random.PRNGKey(0)
    k_mg, k_sit, k_par = jax.random.split(key, 3)

    mg_matrix = jax.random.normal(k_mg, (B, d_grounds, d_model), jnp.float32)
    situation = jax.random.normal(k_sit, (B, d_model), jnp.float32)
    params = init_params(k_par, d_model, h, n_classes)

    pred = moral_ground_forward(mg_matrix, situation, params, tb=TB)
    pred = jax.block_until_ready(pred)

    ref = reference_forward(mg_matrix, situation, params, h)
    # tolerance covers the bf16 casts of intermediate activations feeding the MXU
    np.testing.assert_allclose(np.asarray(pred), np.asarray(ref), rtol=2e-2, atol=2e-2)

    print("KERNEL_OK")
</pallas_src>

<mosaic_0001>
module attributes {stable_mosaic.version = 11 : i64} {
  func.func @moral_ground_kernel(%arg0: i32, %arg1: memref<48x32xbf16, #tpu.memory_space<vmem>>, %arg2: memref<8x32xbf16, #tpu.memory_space<vmem>>, %arg3: memref<32x64xbf16, #tpu.memory_space<vmem>>, %arg4: memref<1x64xf32, #tpu.memory_space<vmem>>, %arg5: memref<32x32xbf16, #tpu.memory_space<vmem>>, %arg6: memref<1x32xf32, #tpu.memory_space<vmem>>, %arg7: memref<32x32xbf16, #tpu.memory_space<vmem>>, %arg8: memref<1x32xf32, #tpu.memory_space<vmem>>, %arg9: memref<32x4xbf16, #tpu.memory_space<vmem>>, %arg10: memref<4x32xbf16, #tpu.memory_space<vmem>>, %arg11: memref<32x32xbf16, #tpu.memory_space<vmem>>, %arg12: memref<32x32xbf16, #tpu.memory_space<vmem>>, %arg13: memref<1x32xf32, #tpu.memory_space<vmem>>, %arg14: memref<32x2xbf16, #tpu.memory_space<vmem>>, %arg15: memref<1x2xf32, #tpu.memory_space<vmem>>, %arg16: memref<8x2xf32, #tpu.memory_space<vmem>>) attributes {dimension_semantics = [#tpu.dimension_semantics<parallel>], iteration_bounds = array<i64: 2>, scalar_prefetch = 0 : i64, scratch_operands = 0 : i64, tpu.core_type = #tpu.core_type<tc>, window_params = [{transform_indices = @transform_0, window_bounds = array<i64: 48, 32>}, {transform_indices = @transform_1, window_bounds = array<i64: 8, 32>}, {pipeline_mode = #tpu.pipeline_mode<synchronous>, transform_indices = @transform_2, window_bounds = array<i64: 32, 64>}, {pipeline_mode = #tpu.pipeline_mode<synchronous>, transform_indices = @transform_3, window_bounds = array<i64: 1, 64>}, {pipeline_mode = #tpu.pipeline_mode<synchronous>, transform_indices = @transform_4, window_bounds = array<i64: 32, 32>}, {pipeline_mode = #tpu.pipeline_mode<synchronous>, transform_indices = @transform_5, window_bounds = array<i64: 1, 32>}, {pipeline_mode = #tpu.pipeline_mode<synchronous>, transform_indices = @transform_6, window_bounds = array<i64: 32, 32>}, {pipeline_mode = #tpu.pipeline_mode<synchronous>, transform_indices = @transform_7, window_bounds = array<i64: 1, 32>}, {pipeline_mode = #tpu.pipeline_mode<synchronous>, transform_indices = @transform_8, window_bounds = array<i64: 32, 4>}, {pipeline_mode = #tpu.pipeline_mode<synchronous>, transform_indices = @transform_9, window_bounds = array<i64: 4, 32>}, {pipeline_mode = #tpu.pipeline_mode<synchronous>, transform_indices = @transform_10, window_bounds = array<i64: 32, 32>}, {pipeline_mode = #tpu.pipeline_mode<synchronous>, transform_indices = @transform_11, window_bounds = array<i64: 32, 32>}, {pipeline_mode = #tpu.pipeline_mode<synchronous>, transform_indices = @transform_12, window_bounds = array<i64: 1, 32>}, {pipeline_mode = #tpu.pipeline_mode<synchronous>, transform_indices = @transform_13, window_bounds = array<i64: 32, 2>}, {pipeline_mode = #tpu.pipeline_mode<synchronous>, transform_indices = @transform_14, window_bounds = array<i64: 1, 2>}, {transform_indices = @transform_15, window_bounds = array<i64: 8, 2>}]} {
    %c0 = arith.constant 0 : index
    %c0_0 = arith.constant 0 : index
    %0 = vector.load %arg2[%c0, %c0_0] : memref<8x32xbf16, #tpu.memory_space<vmem>>, vector<8x32xbf16>
    %c0_1 = arith.constant 0 : index
    %c0_2 = arith.constant 0 : index
    %1 = vector.load %arg5[%c0_1, %c0_2] : memref<32x32xbf16, #tpu.memory_space<vmem>>, vector<32x32xbf16>
    %cst = arith.constant dense<0.000000e+00> : vector<8x32xf32>
    %2 = tpu.matmul %0, %1, %cst {dimension_numbers = #tpu.dot_dimension_numbers<[1], [0], [0], [1], [0, 0, 1, 1], [], []>} : vector<8x32xbf16>, vector<32x32xbf16>, vector<8x32xf32> -> vector<8x32xf32>
    %c0_3 = arith.constant 0 : index
    %c0_4 = arith.constant 0 : index
    %3 = vector.load %arg6[%c0_3, %c0_4] : memref<1x32xf32, #tpu.memory_space<vmem>>, vector<1x32xf32>
    %4 = vector.broadcast %3 : vector<1x32xf32> to vector<8x32xf32>
    %5 = arith.addf %2, %4 : vector<8x32xf32>
    %c0_5 = arith.constant 0 : index
    %c0_6 = arith.constant 0 : index
    %6 = vector.load %arg1[%c0_5, %c0_6] : memref<48x32xbf16, #tpu.memory_space<vmem>>, vector<48x32xbf16>
    %c0_7 = arith.constant 0 : index
    %c0_8 = arith.constant 0 : index
    %7 = vector.load %arg3[%c0_7, %c0_8] : memref<32x64xbf16, #tpu.memory_space<vmem>>, vector<32x64xbf16>
    %cst_9 = arith.constant dense<0.000000e+00> : vector<48x64xf32>
    %8 = tpu.matmul %6, %7, %cst_9 {dimension_numbers = #tpu.dot_dimension_numbers<[1], [0], [0], [1], [0, 0, 1, 1], [], []>} : vector<48x32xbf16>, vector<32x64xbf16>, vector<48x64xf32> -> vector<48x64xf32>
    %c0_10 = arith.constant 0 : index
    %c0_11 = arith.constant 0 : index
    %9 = vector.load %arg4[%c0_10, %c0_11] : memref<1x64xf32, #tpu.memory_space<vmem>>, vector<1x64xf32>
    %10 = vector.broadcast %9 : vector<1x64xf32> to vector<48x64xf32>
    %11 = arith.addf %8, %10 : vector<48x64xf32>
    %12 = vector.extract_strided_slice %11 {offsets = [0, 0], sizes = [48, 32], strides = [1, 1]} : vector<48x64xf32> to vector<48x32xf32>
    %13 = vector.extract_strided_slice %11 {offsets = [0, 32], sizes = [48, 32], strides = [1, 1]} : vector<48x64xf32> to vector<48x32xf32>
    %14 = vector.shape_cast %12 : vector<48x32xf32> to vector<6x8x32xf32>
    %15 = vector.shape_cast %5 : vector<8x32xf32> to vector<1x8x32xf32>
    %16 = vector.broadcast %15 : vector<1x8x32xf32> to vector<6x8x32xf32>
    %17 = arith.mulf %14, %16 : vector<6x8x32xf32>
    %18 = vector.shape_cast %17 : vector<6x8x32xf32> to vector<48x32xf32>
    %19 = arith.truncf %18 : vector<48x32xf32> to vector<48x32xbf16>
    %c0_12 = arith.constant 0 : index
    %c0_13 = arith.constant 0 : index
    %20 = vector.load %arg9[%c0_12, %c0_13] : memref<32x4xbf16, #tpu.memory_space<vmem>>, vector<32x4xbf16>
    %cst_14 = arith.constant dense<0.000000e+00> : vector<48x4xf32>
    %21 = tpu.matmul %19, %20, %cst_14 {dimension_numbers = #tpu.dot_dimension_numbers<[1], [0], [0], [1], [0, 0, 1, 1], [], []>} : vector<48x32xbf16>, vector<32x4xbf16>, vector<48x4xf32> -> vector<48x4xf32>
    %22 = vector.shape_cast %21 : vector<48x4xf32> to vector<6x8x4xf32>
    %cst_15 = arith.constant dense<0xFF800000> : vector<8x4xf32>
    %23 = vector.multi_reduction <maximumf>, %22, %cst_15 [0] : vector<6x8x4xf32> to vector<8x4xf32>
    %24 = vector.shape_cast %23 : vector<8x4xf32> to vector<1x8x4xf32>
    %25 = vector.broadcast %24 : vector<1x8x4xf32> to vector<6x8x4xf32>
    %26 = arith.subf %22, %25 : vector<6x8x4xf32>
    %27 = math.exp %26 : vector<6x8x4xf32>
    %cst_16 = arith.constant dense<0.000000e+00> : vector<8x4xf32>
    %28 = vector.multi_reduction <add>, %27, %cst_16 [0] : vector<6x8x4xf32> to vector<8x4xf32>
    %29 = tpu.reciprocal %28 {approx = true} : vector<8x4xf32> -> vector<8x4xf32>
    %30 = vector.shape_cast %29 : vector<8x4xf32> to vector<1x8x4xf32>
    %31 = vector.broadcast %30 : vector<1x8x4xf32> to vector<6x8x4xf32>
    %32 = arith.mulf %27, %31 : vector<6x8x4xf32>
    %33 = vector.shape_cast %32 : vector<6x8x4xf32> to vector<48x4xf32>
    %34 = arith.truncf %33 : vector<48x4xf32> to vector<48x4xbf16>
    %c0_17 = arith.constant 0 : index
    %c0_18 = arith.constant 0 : index
    %35 = vector.load %arg10[%c0_17, %c0_18] : memref<4x32xbf16, #tpu.memory_space<vmem>>, vector<4x32xbf16>
    %cst_19 = arith.constant dense<0.000000e+00> : vector<48x32xf32>
    %36 = tpu.matmul %34, %35, %cst_19 {dimension_numbers = #tpu.dot_dimension_numbers<[1], [0], [0], [1], [0, 0, 1, 1], [], []>} : vector<48x4xbf16>, vector<4x32xbf16>, vector<48x32xf32> -> vector<48x32xf32>
    %37 = arith.mulf %36, %13 : vector<48x32xf32>
    %38 = vector.shape_cast %37 : vector<48x32xf32> to vector<6x8x32xf32>
    %cst_20 = arith.constant dense<0.000000e+00> : vector<8x32xf32>
    %39 = vector.multi_reduction <add>, %38, %cst_20 [0] : vector<6x8x32xf32> to vector<8x32xf32>
    %40 = arith.truncf %39 : vector<8x32xf32> to vector<8x32xbf16>
    %c0_21 = arith.constant 0 : index
    %c0_22 = arith.constant 0 : index
    %41 = vector.load %arg7[%c0_21, %c0_22] : memref<32x32xbf16, #tpu.memory_space<vmem>>, vector<32x32xbf16>
    %cst_23 = arith.constant dense<0.000000e+00> : vector<8x32xf32>
    %42 = tpu.matmul %40, %41, %cst_23 {dimension_numbers = #tpu.dot_dimension_numbers<[1], [0], [0], [1], [0, 0, 1, 1], [], []>} : vector<8x32xbf16>, vector<32x32xbf16>, vector<8x32xf32> -> vector<8x32xf32>
    %c0_24 = arith.constant 0 : index
    %c0_25 = arith.constant 0 : index
    %43 = vector.load %arg8[%c0_24, %c0_25] : memref<1x32xf32, #tpu.memory_space<vmem>>, vector<1x32xf32>
    %cst_26 = arith.constant 6.000000e+00 : f32
    %44 = vector.broadcast %cst_26 : f32 to vector<1x32xf32>
    %45 = arith.mulf %44, %43 : vector<1x32xf32>
    %46 = vector.broadcast %45 : vector<1x32xf32> to vector<8x32xf32>
    %47 = arith.addf %42, %46 : vector<8x32xf32>
    %48 = arith.truncf %47 : vector<8x32xf32> to vector<8x32xbf16>
    %c0_27 = arith.constant 0 : index
    %c0_28 = arith.constant 0 : index
    %49 = vector.load %arg11[%c0_27, %c0_28] : memref<32x32xbf16, #tpu.memory_space<vmem>>, vector<32x32xbf16>
    %cst_29 = arith.constant dense<0.000000e+00> : vector<8x32xf32>
    %50 = tpu.matmul %48, %49, %cst_29 {dimension_numbers = #tpu.dot_dimension_numbers<[1], [0], [0], [1], [0, 0, 1, 1], [], []>} : vector<8x32xbf16>, vector<32x32xbf16>, vector<8x32xf32> -> vector<8x32xf32>
    %c0_30 = arith.constant 0 : index
    %c0_31 = arith.constant 0 : index
    %51 = vector.load %arg12[%c0_30, %c0_31] : memref<32x32xbf16, #tpu.memory_space<vmem>>, vector<32x32xbf16>
    %cst_32 = arith.constant dense<0.000000e+00> : vector<8x32xf32>
    %52 = tpu.matmul %0, %51, %cst_32 {dimension_numbers = #tpu.dot_dimension_numbers<[1], [0], [0], [1], [0, 0, 1, 1], [], []>} : vector<8x32xbf16>, vector<32x32xbf16>, vector<8x32xf32> -> vector<8x32xf32>
    %53 = arith.addf %50, %52 : vector<8x32xf32>
    %c0_33 = arith.constant 0 : index
    %c0_34 = arith.constant 0 : index
    %54 = vector.load %arg13[%c0_33, %c0_34] : memref<1x32xf32, #tpu.memory_space<vmem>>, vector<1x32xf32>
    %55 = vector.broadcast %54 : vector<1x32xf32> to vector<8x32xf32>
    %56 = arith.addf %53, %55 : vector<8x32xf32>
    %cst_35 = arith.constant 0.000000e+00 : f32
    %57 = vector.broadcast %cst_35 : f32 to vector<8x32xf32>
    %58 = arith.maximumf %56, %57 : vector<8x32xf32>
    %59 = arith.truncf %58 : vector<8x32xf32> to vector<8x32xbf16>
    %c0_36 = arith.constant 0 : index
    %c0_37 = arith.constant 0 : index
    %60 = vector.load %arg14[%c0_36, %c0_37] : memref<32x2xbf16, #tpu.memory_space<vmem>>, vector<32x2xbf16>
    %cst_38 = arith.constant dense<0.000000e+00> : vector<8x2xf32>
    %61 = tpu.matmul %59, %60, %cst_38 {dimension_numbers = #tpu.dot_dimension_numbers<[1], [0], [0], [1], [0, 0, 1, 1], [], []>} : vector<8x32xbf16>, vector<32x2xbf16>, vector<8x2xf32> -> vector<8x2xf32>
    %c0_39 = arith.constant 0 : index
    %c0_40 = arith.constant 0 : index
    %62 = vector.load %arg15[%c0_39, %c0_40] : memref<1x2xf32, #tpu.memory_space<vmem>>, vector<1x2xf32>
    %63 = vector.broadcast %62 : vector<1x2xf32> to vector<8x2xf32>
    %64 = arith.addf %61, %63 : vector<8x2xf32>
    %cst_41 = arith.constant dense<0xFF800000> : vector<8xf32>
    %65 = vector.multi_reduction <maximumf>, %64, %cst_41 [1] : vector<8x2xf32> to vector<8xf32>
    %66 = vector.shape_cast %65 : vector<8xf32> to vector<8x1xf32>
    %67 = vector.broadcast %66 : vector<8x1xf32> to vector<8x2xf32>
    %68 = arith.subf %64, %67 : vector<8x2xf32>
    %69 = math.exp %68 : vector<8x2xf32>
    %cst_42 = arith.constant dense<0.000000e+00> : vector<8xf32>
    %70 = vector.multi_reduction <add>, %69, %cst_42 [1] : vector<8x2xf32> to vector<8xf32>
    %71 = vector.shape_cast %70 : vector<8xf32> to vector<8x1xf32>
    %72 = vector.broadcast %71 : vector<8x1xf32> to vector<8x2xf32>
    %73 = arith.divf %69, %72 : vector<8x2xf32>
    %c0_43 = arith.constant 0 : index
    %c0_44 = arith.constant 0 : index
    %74 = vector.load %arg16[%c0_43, %c0_44] : memref<8x2xf32, #tpu.memory_space<vmem>>, vector<8x2xf32>
    tpu.vector_store %arg16[%c0_43, %c0_44], %73 {strides = array<i32>} : memref<8x2xf32, #tpu.memory_space<vmem>>, vector<8x2xf32>,
    return
  }
  func.func @transform_0(%arg0: i32) -> (i32, i32) {
    %c0_i32 = arith.constant 0 : i32
    %c0_i32_0 = arith.constant 0 : i32
    return %arg0, %c0_i32 : i32, i32
  }
  func.func @transform_1(%arg0: i32) -> (i32, i32) {
    %c0_i32 = arith.constant 0 : i32
    %c0_i32_0 = arith.constant 0 : i32
    return %arg0, %c0_i32 : i32, i32
  }
  func.func @transform_2(%arg0: i32) -> (i32, i32) {
    %c0_i32 = arith.constant 0 : i32
    %c0_i32_0 = arith.constant 0 : i32
    %c0_i32_1 = arith.constant 0 : i32
    return %c0_i32, %c0_i32_0 : i32, i32
  }
  func.func @transform_3(%arg0: i32) -> (i32, i32) {
    %c0_i32 = arith.constant 0 : i32
    %c0_i32_0 = arith.constant 0 : i32
    %c0_i32_1 = arith.constant 0 : i32
    return %c0_i32, %c0_i32_0 : i32, i32
  }
  func.func @transform_4(%arg0: i32) -> (i32, i32) {
    %c0_i32 = arith.constant 0 : i32
    %c0_i32_0 = arith.constant 0 : i32
    %c0_i32_1 = arith.constant 0 : i32
    return %c0_i32, %c0_i32_0 : i32, i32
  }
  func.func @transform_5(%arg0: i32) -> (i32, i32) {
    %c0_i32 = arith.constant 0 : i32
    %c0_i32_0 = arith.constant 0 : i32
    %c0_i32_1 = arith.constant 0 : i32
    return %c0_i32, %c0_i32_0 : i32, i32
  }
  func.func @transform_6(%arg0: i32) -> (i32, i32) {
    %c0_i32 = arith.constant 0 : i32
    %c0_i32_0 = arith.constant 0 : i32
    %c0_i32_1 = arith.constant 0 : i32
    return %c0_i32, %c0_i32_0 : i32, i32
  }
  func.func @transform_7(%arg0: i32) -> (i32, i32) {
    %c0_i32 = arith.constant 0 : i32
    %c0_i32_0 = arith.constant 0 : i32
    %c0_i32_1 = arith.constant 0 : i32
    return %c0_i32, %c0_i32_0 : i32, i32
  }
  func.func @transform_8(%arg0: i32) -> (i32, i32) {
    %c0_i32 = arith.constant 0 : i32
    %c0_i32_0 = arith.constant 0 : i32
    %c0_i32_1 = arith.constant 0 : i32
    return %c0_i32, %c0_i32_0 : i32, i32
  }
  func.func @transform_9(%arg0: i32) -> (i32, i32) {
    %c0_i32 = arith.constant 0 : i32
    %c0_i32_0 = arith.constant 0 : i32
    %c0_i32_1 = arith.constant 0 : i32
    return %c0_i32, %c0_i32_0 : i32, i32
  }
  func.func @transform_10(%arg0: i32) -> (i32, i32) {
    %c0_i32 = arith.constant 0 : i32
    %c0_i32_0 = arith.constant 0 : i32
    %c0_i32_1 = arith.constant 0 : i32
    return %c0_i32, %c0_i32_0 : i32, i32
  }
  func.func @transform_11(%arg0: i32) -> (i32, i32) {
    %c0_i32 = arith.constant 0 : i32
    %c0_i32_0 = arith.constant 0 : i32
    %c0_i32_1 = arith.constant 0 : i32
    return %c0_i32, %c0_i32_0 : i32, i32
  }
  func.func @transform_12(%arg0: i32) -> (i32, i32) {
    %c0_i32 = arith.constant 0 : i32
    %c0_i32_0 = arith.constant 0 : i32
    %c0_i32_1 = arith.constant 0 : i32
    return %c0_i32, %c0_i32_0 : i32, i32
  }
  func.func @transform_13(%arg0: i32) -> (i32, i32) {
    %c0_i32 = arith.constant 0 : i32
    %c0_i32_0 = arith.constant 0 : i32
    %c0_i32_1 = arith.constant 0 : i32
    return %c0_i32, %c0_i32_0 : i32, i32
  }
  func.func @transform_14(%arg0: i32) -> (i32, i32) {
    %c0_i32 = arith.constant 0 : i32
    %c0_i32_0 = arith.constant 0 : i32
    %c0_i32_1 = arith.constant 0 : i32
    return %c0_i32, %c0_i32_0 : i32, i32
  }
  func.func @transform_15(%arg0: i32) -> (i32, i32) {
    %c0_i32 = arith.constant 0 : i32
    %c0_i32_0 = arith.constant 0 : i32
    return %arg0, %c0_i32 : i32, i32
  }
}

</mosaic_0001>

<llo_original>
// kernel: tpu_custom_call.1
$region0: #{tpu_custom_call.1}
  #allocation0 [shape = 'u32[]', space=smem, size = 0x4, offset = 0x4, fixed_abs, tag = 'smem constant byte address 0x4 - core index']
  #allocation1 [shape = 'u32[72,128]{1,0:T(1,128)}', space=vmem, size = 0x9000, scoped, tag = 'internal scratch']
  %s0 = inlined_call_operand.vmem [shape: bf16[96,32], index: 0, kind: input, shape index: {}]
  %s1 = inlined_call_operand.hbm [shape: bf16[16,32], index: 1, kind: input, shape index: {}]
  %s2 = inlined_call_operand.vmem [shape: bf16[32,64], index: 2, kind: input, shape index: {}]
  %s3 = inlined_call_operand.vmem [shape: f32[1,64], index: 3, kind: input, shape index: {}]
  %s4 = inlined_call_operand.vmem [shape: bf16[32,32], index: 4, kind: input, shape index: {}]
  %s5 = inlined_call_operand.hbm [shape: f32[1,32], index: 5, kind: input, shape index: {}]
  %s6 = inlined_call_operand.vmem [shape: bf16[32,32], index: 6, kind: input, shape index: {}]
  %s7 = inlined_call_operand.vmem [shape: f32[1,32], index: 7, kind: input, shape index: {}]
  %s8 = inlined_call_operand.vmem [shape: bf16[32,4], index: 8, kind: input, shape index: {}]
  %s9 = inlined_call_operand.vmem [shape: bf16[4,32], index: 9, kind: input, shape index: {}]
  %s10 = inlined_call_operand.vmem [shape: bf16[32,32], index: 10, kind: input, shape index: {}]
  %s11 = inlined_call_operand.vmem [shape: bf16[32,32], index: 11, kind: input, shape index: {}]
  %s12 = inlined_call_operand.vmem [shape: f32[1,32], index: 12, kind: input, shape index: {}]
  %s13 = inlined_call_operand.vmem [shape: bf16[32,2], index: 13, kind: input, shape index: {}]
  %s14 = inlined_call_operand.vmem [shape: f32[1,2], index: 14, kind: input, shape index: {}]
  %s15 = inlined_call_operand.vmem [shape: f32[16,2], index: 15, kind: output, shape index: {}]
  %s16 = sld [smem:[#allocation0]]
  $region101: #{tpu_custom_call.1} parent=0
    _
  %s18 = ssub.s32 1, %s16
  %s19 = scalar_select 0, %s18, %s16
  $region1: #{tpu_custom_call.1} parent=0
    #allocation2 [shape = 'u8[4096]{0}', space=vmem, size = 0x1000, scoped, tag = 'input window, operand 1']
    #allocation3 [shape = 's32[2]{0}', space=sflag, size = 0x8, scoped, tag = 'scoped memory for tpu_custom_call.1']
    #allocation4 [shape = 'u8[512]{0}', space=vmem, size = 0x400, scoped, tag = 'input window, operand 5, single buffered']
    #allocation5 [shape = 's32[1]{0}', space=sflag, size = 0x4, scoped, tag = 'scoped memory for tpu_custom_call.1']
    %20 = vsyncpa [#allocation3], 0
    %s21 = scalar_lea.sflag [#allocation3], 1
    %22 = vsyncpa %s21, 0
    %23 = vsyncpa [#allocation5], 0
    loop: start=0, step=1, limit=4
    $region2: #{tpu_custom_call.1} parent=1 // loop_pre_header
      _
    $region3: #{tpu_custom_call.1} parent=1 // loop_header
      %s25 = sphi 0, %s29
      %p26 = scmp.ge.s32.totalorder %s25, 4
      %s35 = sphi 0, %s37
      %s38 = sphi 0, %s35
      %s39 = sphi 0, %s38
      %s55 = sphi 0, %s39
      %s61 = sphi 0, %s63
      %s64 = sphi 0, %s61
      %s65 = sphi 0, %s64
      %s81 = sphi 0, %s65
      %s85 = sphi 0, %s85
      %s87 = sphi 0, %s85
      %s88 = sphi 0, %s87
      %s102 = sphi 0, %s88
      %s106 = sphi 0, %s106
      %s108 = sphi 0, %s106
      %s109 = sphi 0, %s108
      %s123 = sphi 0, %s109
      %s127 = sphi 0, %s127
      %s129 = sphi 0, %s127
      %s130 = sphi 0, %s129
      %s144 = sphi 0, %s130
      %s148 = sphi 0, %s148
      %s150 = sphi 0, %s148
      %s151 = sphi 0, %s150
      %s165 = sphi 0, %s151
      %s169 = sphi 0, %s169
      %s171 = sphi 0, %s169
      %s172 = sphi 0, %s171
      %s186 = sphi 0, %s172
      %s190 = sphi 0, %s190
      %s192 = sphi 0, %s190
      %s193 = sphi 0, %s192
      %s207 = sphi 0, %s193
      %s211 = sphi 0, %s211
      %s213 = sphi 0, %s211
      %s214 = sphi 0, %s213
      %s228 = sphi 0, %s214
      %s232 = sphi 0, %s232
      %s234 = sphi 0, %s232
      %s235 = sphi 0, %s234
      %s249 = sphi 0, %s235
      %s253 = sphi 0, %s253
      %s255 = sphi 0, %s253
      %s256 = sphi 0, %s255
      %s270 = sphi 0, %s256
      %s274 = sphi 0, %s274
      %s276 = sphi 0, %s274
      %s277 = sphi 0, %s276
      %s291 = sphi 0, %s277
      %s295 = sphi 0, %s295
      %s297 = sphi 0, %s295
      %s298 = sphi 0, %s297
      %s312 = sphi 0, %s298
      %s316 = sphi 0, %s316
      %s318 = sphi 0, %s316
      %s319 = sphi 0, %s318
      %s333 = sphi 0, %s319
      %s337 = sphi 0, %s337
      %s339 = sphi 0, %s337
      %s340 = sphi 0, %s339
      %s354 = sphi 0, %s340
      %s360 = sphi 0, %s362
      %s363 = sphi 0, %s360
      %s364 = sphi 0, %s363
      %s380 = sphi 0, %s364
    $region4: #{tpu_custom_call.1} parent=1 // loop_header_branch
      %28 = sbr.rel (%p26) target = $region8
    $region5: #{tpu_custom_call.1} parent=1 // loop_body
      %s30 = ssub.s32 %s25, 1
      %s31 = ssub.s32 %s25, 2
      %s32 = sadd.s32 %s25, 1
      %s33 = ssub.s32 %s25, %s32
      %p34 = scmp.eq.s32.totalorder %s33, 0
      %s36 = sadd.s32 %s35, 1
      %s37 = scalar_select %p34, %s35, %s36
      %p40 = pneg %p34
      %p41 = scmp.eq.s32.totalorder %s25, 1
      %p42 = por %p40, %p41
      %p43 = scmp.ne.s32.totalorder %s35, %s38
      %p44 = scmp.eq.s32.totalorder %s25, 0
      %p45 = por %p43, %p44
      %p46 = scmp.ne.s32.totalorder %s35, %s38
      %p47 = scmp.eq.s32.totalorder %s30, 1
      %p48 = por %p46, %p47
      %p49 = scmp.ne.s32.totalorder %s38, %s39
      %p50 = scmp.eq.s32.totalorder %s30, 0
      %p51 = por %p49, %p50
      %p52 = scmp.ne.s32.totalorder %s38, %s39
      %p53 = scmp.eq.s32.totalorder %s31, 1
      %p54 = por %p52, %p53
      %p56 = scmp.ne.s32.totalorder %s39, %s55
      %p57 = scmp.eq.s32.totalorder %s31, 0
      %p58 = por %p56, %p57
      %s59 = ssub.s32 %s25, %s32
      %p60 = scmp.eq.s32.totalorder %s59, 0
      %s62 = sadd.s32 %s61, 1
      %s63 = scalar_select %p60, %s61, %s62
      %p66 = pneg %p60
      %p67 = scmp.eq.s32.totalorder %s25, 1
      %p68 = por %p66, %p67
      %p69 = scmp.ne.s32.totalorder %s61, %s64
      %p70 = scmp.eq.s32.totalorder %s25, 0
      %p71 = por %p69, %p70
      %p72 = scmp.ne.s32.totalorder %s61, %s64
      %p73 = scmp.eq.s32.totalorder %s30, 1
      %p74 = por %p72, %p73
      %p75 = scmp.ne.s32.totalorder %s64, %s65
      %p76 = scmp.eq.s32.totalorder %s30, 0
      %p77 = por %p75, %p76
      %p78 = scmp.ne.s32.totalorder %s64, %s65
      %p79 = scmp.eq.s32.totalorder %s31, 1
      %p80 = por %p78, %p79
      %p82 = scmp.ne.s32.totalorder %s65, %s81
      %p83 = scmp.eq.s32.totalorder %s31, 0
      %p84 = por %p82, %p83
      %s86 = sadd.s32 %s85, 1
      %p89 = scmp.eq.s32.totalorder %s25, 1
      %p90 = scmp.ne.s32.totalorder %s85, %s87
      %p91 = scmp.eq.s32.totalorder %s25, 0
      %p92 = por %p90, %p91
      %p93 = scmp.ne.s32.totalorder %s85, %s87
      %p94 = scmp.eq.s32.totalorder %s30, 1
      %p95 = por %p93, %p94
      %p96 = scmp.ne.s32.totalorder %s87, %s88
      %p97 = scmp.eq.s32.totalorder %s30, 0
      %p98 = por %p96, %p97
      %p99 = scmp.ne.s32.totalorder %s87, %s88
      %p100 = scmp.eq.s32.totalorder %s31, 1
      %p101 = por %p99, %p100
      %p103 = scmp.ne.s32.totalorder %s88, %s102
      %p104 = scmp.eq.s32.totalorder %s31, 0
      %p105 = por %p103, %p104
      %s107 = sadd.s32 %s106, 1
      %p110 = scmp.eq.s32.totalorder %s25, 1
      %p111 = scmp.ne.s32.totalorder %s106, %s108
      %p112 = scmp.eq.s32.totalorder %s25, 0
      %p113 = por %p111, %p112
      %p114 = scmp.ne.s32.totalorder %s106, %s108
      %p115 = scmp.eq.s32.totalorder %s30, 1
      %p116 = por %p114, %p115
      %p117 = scmp.ne.s32.totalorder %s108, %s109
      %p118 = scmp.eq.s32.totalorder %s30, 0
      %p119 = por %p117, %p118
      %p120 = scmp.ne.s32.totalorder %s108, %s109
      %p121 = scmp.eq.s32.totalorder %s31, 1
      %p122 = por %p120, %p121
      %p124 = scmp.ne.s32.totalorder %s109, %s123
      %p125 = scmp.eq.s32.totalorder %s31, 0
      %p126 = por %p124, %p125
      %s128 = sadd.s32 %s127, 1
      %p131 = scmp.eq.s32.totalorder %s25, 1
      %p132 = scmp.ne.s32.totalorder %s127, %s129
      %p133 = scmp.eq.s32.totalorder %s25, 0
      %p134 = por %p132, %p133
      %p135 = scmp.ne.s32.totalorder %s127, %s129
      %p136 = scmp.eq.s32.totalorder %s30, 1
      %p137 = por %p135, %p136
      %p138 = scmp.ne.s32.totalorder %s129, %s130
      %p139 = scmp.eq.s32.totalorder %s30, 0
      %p140 = por %p138, %p139
      %p141 = scmp.ne.s32.totalorder %s129, %s130
      %p142 = scmp.eq.s32.totalorder %s31, 1
      %p143 = por %p141, %p142
      %p145 = scmp.ne.s32.totalorder %s130, %s144
      %p146 = scmp.eq.s32.totalorder %s31, 0
      %p147 = por %p145, %p146
      %s149 = sadd.s32 %s148, 1
      %p152 = scmp.eq.s32.totalorder %s25, 1
      %p153 = scmp.ne.s32.totalorder %s148, %s150
      %p154 = scmp.eq.s32.totalorder %s25, 0
      %p155 = por %p153, %p154
      %p156 = scmp.ne.s32.totalorder %s148, %s150
      %p157 = scmp.eq.s32.totalorder %s30, 1
      %p158 = por %p156, %p157
      %p159 = scmp.ne.s32.totalorder %s150, %s151
      %p160 = scmp.eq.s32.totalorder %s30, 0
      %p161 = por %p159, %p160
      %p162 = scmp.ne.s32.totalorder %s150, %s151
      %p163 = scmp.eq.s32.totalorder %s31, 1
      %p164 = por %p162, %p163
      %p166 = scmp.ne.s32.totalorder %s151, %s165
      %p167 = scmp.eq.s32.totalorder %s31, 0
      %p168 = por %p166, %p167
      %s170 = sadd.s32 %s169, 1
      %p173 = scmp.eq.s32.totalorder %s25, 1
      %p174 = scmp.ne.s32.totalorder %s169, %s171
      %p175 = scmp.eq.s32.totalorder %s25, 0
      %p176 = por %p174, %p175
      %p177 = scmp.ne.s32.totalorder %s169, %s171
      %p178 = scmp.eq.s32.totalorder %s30, 1
      %p179 = por %p177, %p178
      %p180 = scmp.ne.s32.totalorder %s171, %s172
      %p181 = scmp.eq.s32.totalorder %s30, 0
      %p182 = por %p180, %p181
      %p183 = scmp.ne.s32.totalorder %s171, %s172
      %p184 = scmp.eq.s32.totalorder %s31, 1
      %p185 = por %p183, %p184
      %p187 = scmp.ne.s32.totalorder %s172, %s186
      %p188 = scmp.eq.s32.totalorder %s31, 0
      %p189 = por %p187, %p188
      %s191 = sadd.s32 %s190, 1
      %p194 = scmp.eq.s32.totalorder %s25, 1
      %p195 = scmp.ne.s32.totalorder %s190, %s192
      %p196 = scmp.eq.s32.totalorder %s25, 0
      %p197 = por %p195, %p196
      %p198 = scmp.ne.s32.totalorder %s190, %s192
      %p199 = scmp.eq.s32.totalorder %s30, 1
      %p200 = por %p198, %p199
      %p201 = scmp.ne.s32.totalorder %s192, %s193
      %p202 = scmp.eq.s32.totalorder %s30, 0
      %p203 = por %p201, %p202
      %p204 = scmp.ne.s32.totalorder %s192, %s193
      %p205 = scmp.eq.s32.totalorder %s31, 1
      %p206 = por %p204, %p205
      %p208 = scmp.ne.s32.totalorder %s193, %s207
      %p209 = scmp.eq.s32.totalorder %s31, 0
      %p210 = por %p208, %p209
      %s212 = sadd.s32 %s211, 1
      %p215 = scmp.eq.s32.totalorder %s25, 1
      %p216 = scmp.ne.s32.totalorder %s211, %s213
      %p217 = scmp.eq.s32.totalorder %s25, 0
      %p218 = por %p216, %p217
      %p219 = scmp.ne.s32.totalorder %s211, %s213
      %p220 = scmp.eq.s32.totalorder %s30, 1
      %p221 = por %p219, %p220
      %p222 = scmp.ne.s32.totalorder %s213, %s214
      %p223 = scmp.eq.s32.totalorder %s30, 0
      %p224 = por %p222, %p223
      %p225 = scmp.ne.s32.totalorder %s213, %s214
      %p226 = scmp.eq.s32.totalorder %s31, 1
      %p227 = por %p225, %p226
      %p229 = scmp.ne.s32.totalorder %s214, %s228
      %p230 = scmp.eq.s32.totalorder %s31, 0
      %p231 = por %p229, %p230
      %s233 = sadd.s32 %s232, 1
      %p236 = scmp.eq.s32.totalorder %s25, 1
      %p237 = scmp.ne.s32.totalorder %s232, %s234
      %p238 = scmp.eq.s32.totalorder %s25, 0
      %p239 = por %p237, %p238
      %p240 = scmp.ne.s32.totalorder %s232, %s234
      %p241 = scmp.eq.s32.totalorder %s30, 1
      %p242 = por %p240, %p241
      %p243 = scmp.ne.s32.totalorder %s234, %s235
      %p244 = scmp.eq.s32.totalorder %s30, 0
      %p245 = por %p243, %p244
      %p246 = scmp.ne.s32.totalorder %s234, %s235
      %p247 = scmp.eq.s32.totalorder %s31, 1
      %p248 = por %p246, %p247
      %p250 = scmp.ne.s32.totalorder %s235, %s249
      %p251 = scmp.eq.s32.totalorder %s31, 0
      %p252 = por %p250, %p251
      %s254 = sadd.s32 %s253, 1
      %p257 = scmp.eq.s32.totalorder %s25, 1
      %p258 = scmp.ne.s32.totalorder %s253, %s255
      %p259 = scmp.eq.s32.totalorder %s25, 0
      %p260 = por %p258, %p259
      %p261 = scmp.ne.s32.totalorder %s253, %s255
      %p262 = scmp.eq.s32.totalorder %s30, 1
      %p263 = por %p261, %p262
      %p264 = scmp.ne.s32.totalorder %s255, %s256
      %p265 = scmp.eq.s32.totalorder %s30, 0
      %p266 = por %p264, %p265
      %p267 = scmp.ne.s32.totalorder %s255, %s256
      %p268 = scmp.eq.s32.totalorder %s31, 1
      %p269 = por %p267, %p268
      %p271 = scmp.ne.s32.totalorder %s256, %s270
      %p272 = scmp.eq.s32.totalorder %s31, 0
      %p273 = por %p271, %p272
      %s275 = sadd.s32 %s274, 1
      %p278 = scmp.eq.s32.totalorder %s25, 1
      %p279 = scmp.ne.s32.totalorder %s274, %s276
      %p280 = scmp.eq.s32.totalorder %s25, 0
      %p281 = por %p279, %p280
      %p282 = scmp.ne.s32.totalorder %s274, %s276
      %p283 = scmp.eq.s32.totalorder %s30, 1
      %p284 = por %p282, %p283
      %p285 = scmp.ne.s32.totalorder %s276, %s277
      %p286 = scmp.eq.s32.totalorder %s30, 0
      %p287 = por %p285, %p286
      %p288 = scmp.ne.s32.totalorder %s276, %s277
      %p289 = scmp.eq.s32.totalorder %s31, 1
      %p290 = por %p288, %p289
      %p292 = scmp.ne.s32.totalorder %s277, %s291
      %p293 = scmp.eq.s32.totalorder %s31, 0
      %p294 = por %p292, %p293
      %s296 = sadd.s32 %s295, 1
      %p299 = scmp.eq.s32.totalorder %s25, 1
      %p300 = scmp.ne.s32.totalorder %s295, %s297
      %p301 = scmp.eq.s32.totalorder %s25, 0
      %p302 = por %p300, %p301
      %p303 = scmp.ne.s32.totalorder %s295, %s297
      %p304 = scmp.eq.s32.totalorder %s30, 1
      %p305 = por %p303, %p304
      %p306 = scmp.ne.s32.totalorder %s297, %s298
      %p307 = scmp.eq.s32.totalorder %s30, 0
      %p308 = por %p306, %p307
      %p309 = scmp.ne.s32.totalorder %s297, %s298
      %p310 = scmp.eq.s32.totalorder %s31, 1
      %p311 = por %p309, %p310
      %p313 = scmp.ne.s32.totalorder %s298, %s312
      %p314 = scmp.eq.s32.totalorder %s31, 0
      %p315 = por %p313, %p314
      %s317 = sadd.s32 %s316, 1
      %p320 = scmp.eq.s32.totalorder %s25, 1
      %p321 = scmp.ne.s32.totalorder %s316, %s318
      %p322 = scmp.eq.s32.totalorder %s25, 0
      %p323 = por %p321, %p322
      %p324 = scmp.ne.s32.totalorder %s316, %s318
      %p325 = scmp.eq.s32.totalorder %s30, 1
      %p326 = por %p324, %p325
      %p327 = scmp.ne.s32.totalorder %s318, %s319
      %p328 = scmp.eq.s32.totalorder %s30, 0
      %p329 = por %p327, %p328
      %p330 = scmp.ne.s32.totalorder %s318, %s319
      %p331 = scmp.eq.s32.totalorder %s31, 1
      %p332 = por %p330, %p331
      %p334 = scmp.ne.s32.totalorder %s319, %s333
      %p335 = scmp.eq.s32.totalorder %s31, 0
      %p336 = por %p334, %p335
      %s338 = sadd.s32 %s337, 1
      %p341 = scmp.eq.s32.totalorder %s25, 1
      %p342 = scmp.ne.s32.totalorder %s337, %s339
      %p343 = scmp.eq.s32.totalorder %s25, 0
      %p344 = por %p342, %p343
      %p345 = scmp.ne.s32.totalorder %s337, %s339
      %p346 = scmp.eq.s32.totalorder %s30, 1
      %p347 = por %p345, %p346
      %p348 = scmp.ne.s32.totalorder %s339, %s340
      %p349 = scmp.eq.s32.totalorder %s30, 0
      %p350 = por %p348, %p349
      %p351 = scmp.ne.s32.totalorder %s339, %s340
      %p352 = scmp.eq.s32.totalorder %s31, 1
      %p353 = por %p351, %p352
      %p355 = scmp.ne.s32.totalorder %s340, %s354
      %p356 = scmp.eq.s32.totalorder %s31, 0
      %p357 = por %p355, %p356
      %s358 = ssub.s32 %s25, %s32
      %p359 = scmp.eq.s32.totalorder %s358, 0
      %s361 = sadd.s32 %s360, 1
      %s362 = scalar_select %p359, %s360, %s361
      %p365 = pneg %p359
      %p366 = scmp.eq.s32.totalorder %s25, 1
      %p367 = por %p365, %p366
      %p368 = scmp.ne.s32.totalorder %s360, %s363
      %p369 = scmp.eq.s32.totalorder %s25, 0
      %p370 = por %p368, %p369
      %p371 = scmp.ne.s32.totalorder %s360, %s363
      %p372 = scmp.eq.s32.totalorder %s30, 1
      %p373 = por %p371, %p372
      %p374 = scmp.ne.s32.totalorder %s363, %s364
      %p375 = scmp.eq.s32.totalorder %s30, 0
      %p376 = por %p374, %p375
      %p377 = scmp.ne.s32.totalorder %s363, %s364
      %p378 = scmp.eq.s32.totalorder %s31, 1
      %p379 = por %p377, %p378
      %p381 = scmp.ne.s32.totalorder %s364, %s380
      %p382 = scmp.eq.s32.totalorder %s31, 0
      %p383 = por %p381, %p382
      %p384 = scmp.le.s32.totalorder 1, %s25
      %p385 = scmp.lt.s32.totalorder %s25, 3
      %p386 = pnand %p384, %p385
      %p387 = pneg %p386
      // Predicated region
      $region9: #{tpu_custom_call.1} parent=5 // pred_check
        _
      $region10: #{tpu_custom_call.1} parent=5 // pred_check_branch
        %389 = sbr.rel (%p386) target = $region12
      $region11: #{tpu_custom_call.1} parent=5 // pred_region
        %s390 = ssub.s32 %s25, 1
        // Predicated region
        $region13: #{tpu_custom_call.1} parent=11 // pred_check
          %p391 = pneg %p98
        $region14: #{tpu_custom_call.1} parent=11 // pred_check_branch
          %393 = sbr.rel (%p391) target = $region16
        $region15: #{tpu_custom_call.1} parent=11 // pred_region
          _
        $region16: #{tpu_custom_call.1} parent=11 // pred_fallthru
          _
        // Predicated region
        $region17: #{tpu_custom_call.1} parent=11 // pred_check
          %p394 = pneg %p119
        $region18: #{tpu_custom_call.1} parent=11 // pred_check_branch
          %396 = sbr.rel (%p394) target = $region20
        $region19: #{tpu_custom_call.1} parent=11 // pred_region
          _
        $region20: #{tpu_custom_call.1} parent=11 // pred_fallthru
          _
        // Predicated region
        $region21: #{tpu_custom_call.1} parent=11 // pred_check
          %p397 = pneg %p140
        $region22: #{tpu_custom_call.1} parent=11 // pred_check_branch
          %399 = sbr.rel (%p397) target = $region24
        $region23: #{tpu_custom_call.1} parent=11 // pred_region
          _
        $region24: #{tpu_custom_call.1} parent=11 // pred_fallthru
          _
        // Predicated region
        $region25: #{tpu_custom_call.1} parent=11 // pred_check
          %p400 = pneg %p161
        $region26: #{tpu_custom_call.1} parent=11 // pred_check_branch
          %402 = sbr.rel (%p400) target = $region28
        $region27: #{tpu_custom_call.1} parent=11 // pred_region
          %404 = vsyncadd [#allocation5], 0
          %s406 = sshll.u32 %s5, 4
          %s407 = int_to_ptr.hbm [resolvable:$true] %s406
          %s408 = sshll.u32 [#allocation4], 4
          %s409 = int_to_ptr.vmem [resolvable:$true] %s408
          %411 = dma.hbm_to_vmem [thread:$0]  %s407, 16, %s409, [#allocation5]
        $region28: #{tpu_custom_call.1} parent=11 // pred_fallthru
          _
        // Predicated region
        $region29: #{tpu_custom_call.1} parent=11 // pred_check
          %p412 = pneg %p182
        $region30: #{tpu_custom_call.1} parent=11 // pred_check_branch
          %414 = sbr.rel (%p412) target = $region32
        $region31: #{tpu_custom_call.1} parent=11 // pred_region
          _
        $region32: #{tpu_custom_call.1} parent=11 // pred_fallthru
          _
        // Predicated region
        $region33: #{tpu_custom_call.1} parent=11 // pred_check
          %p415 = pneg %p203
        $region34: #{tpu_custom_call.1} parent=11 // pred_check_branch
          %417 = sbr.rel (%p415) target = $region36
        $region35: #{tpu_custom_call.1} parent=11 // pred_region
          _
        $region36: #{tpu_custom_call.1} parent=11 // pred_fallthru
          _
        // Predicated region
        $region37: #{tpu_custom_call.1} parent=11 // pred_check
          %p418 = pneg %p224
        $region38: #{tpu_custom_call.1} parent=11 // pred_check_branch
          %420 = sbr.rel (%p418) target = $region40
        $region39: #{tpu_custom_call.1} parent=11 // pred_region
          _
        $region40: #{tpu_custom_call.1} parent=11 // pred_fallthru
          _
        // Predicated region
        $region41: #{tpu_custom_call.1} parent=11 // pred_check
          %p421 = pneg %p245
        $region42: #{tpu_custom_call.1} parent=11 // pred_check_branch
          %423 = sbr.rel (%p421) target = $region44
        $region43: #{tpu_custom_call.1} parent=11 // pred_region
          _
        $region44: #{tpu_custom_call.1} parent=11 // pred_fallthru
          _
        // Predicated region
        $region45: #{tpu_custom_call.1} parent=11 // pred_check
          %p424 = pneg %p266
        $region46: #{tpu_custom_call.1} parent=11 // pred_check_branch
          %426 = sbr.rel (%p424) target = $region48
        $region47: #{tpu_custom_call.1} parent=11 // pred_region
          _
        $region48: #{tpu_custom_call.1} parent=11 // pred_fallthru
          _
        // Predicated region
        $region49: #{tpu_custom_call.1} parent=11 // pred_check
          %p427 = pneg %p287
        $region50: #{tpu_custom_call.1} parent=11 // pred_check_branch
          %429 = sbr.rel (%p427) target = $region52
        $region51: #{tpu_custom_call.1} parent=11 // pred_region
          _
        $region52: #{tpu_custom_call.1} parent=11 // pred_fallthru
          _
        // Predicated region
        $region53: #{tpu_custom_call.1} parent=11 // pred_check
          %p430 = pneg %p308
        $region54: #{tpu_custom_call.1} parent=11 // pred_check_branch
          %432 = sbr.rel (%p430) target = $region56
        $region55: #{tpu_custom_call.1} parent=11 // pred_region
          _
        $region56: #{tpu_custom_call.1} parent=11 // pred_fallthru
          _
        // Predicated region
        $region57: #{tpu_custom_call.1} parent=11 // pred_check
          %p433 = pneg %p329
        $region58: #{tpu_custom_call.1} parent=11 // pred_check_branch
          %435 = sbr.rel (%p433) target = $region60
        $region59: #{tpu_custom_call.1} parent=11 // pred_region
          _
        $region60: #{tpu_custom_call.1} parent=11 // pred_fallthru
          _
        // Predicated region
        $region61: #{tpu_custom_call.1} parent=11 // pred_check
          %p436 = pneg %p350
        $region62: #{tpu_custom_call.1} parent=11 // pred_check_branch
          %438 = sbr.rel (%p436) target = $region64
        $region63: #{tpu_custom_call.1} parent=11 // pred_region
          _
        $region64: #{tpu_custom_call.1} parent=11 // pred_fallthru
          _
      $region12: #{tpu_custom_call.1} parent=5 // pred_fallthru
        _
      %p439 = scmp.lt.s32.totalorder %s25, 2
      // Predicated region
      $region65: #{tpu_custom_call.1} parent=5 // pred_check
        %p440 = pneg %p439
      $region66: #{tpu_custom_call.1} parent=5 // pred_check_branch
        %442 = sbr.rel (%p440) target = $region68
      $region67: #{tpu_custom_call.1} parent=5 // pred_region
        // Predicated region
        $region69: #{tpu_custom_call.1} parent=67 // pred_check
          %p443 = pneg %p45
        $region70: #{tpu_custom_call.1} parent=67 // pred_check_branch
          %445 = sbr.rel (%p443) target = $region72
        $region71: #{tpu_custom_call.1} parent=67 // pred_region
          %s446 = smul.u32 6, %s25
          %p447 = scmp.lt.s32.totalorder %s446, 11
          %s448 = scalar_select %p447, %s446, 11
          %s449 = smul.addr %s448, 4
          %s450 = scalar_lea.vmem %s0, %s449
          %s451 = smul.u32 6, %s25
        $region72: #{tpu_custom_call.1} parent=67 // pred_fallthru
          _
        // Predicated region
        $region73: #{tpu_custom_call.1} parent=67 // pred_check
          %p452 = pneg %p71
        $region74: #{tpu_custom_call.1} parent=67 // pred_check_branch
          %454 = sbr.rel (%p452) target = $region76
        $region75: #{tpu_custom_call.1} parent=67 // pred_region
          %s455 = sand.u32 %s61, 1
          %s456 = scalar_lea.sflag [#allocation3], %s455
          %s457 = sand.u32 %s61, 1
          %s458 = smul.addr %s457, 4
          %s459 = scalar_lea.vmem [#allocation2], %s458
          %461 = vsyncadd %s456, 0
          %s462 = smul.addr %s25, 4
          %s463 = scalar_lea.hbm %s1, %s462
          %s465 = sshll.u32 %s463, 4
          %s466 = int_to_ptr.hbm [resolvable:$true] %s465
          %s467 = sshll.u32 %s459, 4
          %s468 = int_to_ptr.vmem [resolvable:$true] %s467
          %470 = dma.hbm_to_vmem [thread:$0]  %s466, 64, %s468, %s456
        $region76: #{tpu_custom_call.1} parent=67 // pred_fallthru
          _
      $region68: #{tpu_custom_call.1} parent=5 // pred_fallthru
        _
      %p471 = scmp.le.s32.totalorder 1, %s25
      %p472 = scmp.lt.s32.totalorder %s25, 3
      %p473 = pnand %p471, %p472
      %p474 = pneg %p473
      // Predicated region
      $region77: #{tpu_custom_call.1} parent=5 // pred_check
        _
      $region78: #{tpu_custom_call.1} parent=5 // pred_check_branch
        %476 = sbr.rel (%p473) target = $region80
      $region79: #{tpu_custom_call.1} parent=5 // pred_region
        %s477 = ssub.s32 %s25, 1
        %s478 = sand.u32 %s64, 1
        %s479 = scalar_lea.sflag [#allocation3], %s478
        %s480 = sand.u32 %s64, 1
        %s481 = smul.addr %s480, 4
        %s482 = scalar_lea.vmem [#allocation2], %s481
        // Predicated region
        $region81: #{tpu_custom_call.1} parent=79 // pred_check
          %p483 = pneg %p77
        $region82: #{tpu_custom_call.1} parent=79 // pred_check_branch
          %485 = sbr.rel (%p483) target = $region84
        $region83: #{tpu_custom_call.1} parent=79 // pred_region
          %487 = dma.done %s479, 64
        $region84: #{tpu_custom_call.1} parent=79 // pred_fallthru
          _
        // Predicated region
        $region85: #{tpu_custom_call.1} parent=79 // pred_check
          %p488 = pneg %p161
        $region86: #{tpu_custom_call.1} parent=79 // pred_check_branch
          %490 = sbr.rel (%p488) target = $region88
        $region87: #{tpu_custom_call.1} parent=79 // pred_region
          %492 = dma.done [#allocation5], 16
        $region88: #{tpu_custom_call.1} parent=79 // pred_fallthru
          _
        %s493 = smul.u32 6, %s30
        %p494 = scmp.lt.s32.totalorder %s493, 11
        %s495 = scalar_select %p494, %s493, 11
        %s496 = smul.addr %s495, 4
        %s497 = scalar_lea.vmem %s0, %s496
        %p498 = pneg %p51
        %p499 = pneg %p48
        %s500 = sand.u32 %s64, 1
        %s501 = scalar_lea.sflag [#allocation3], %s500
        %s502 = sand.u32 %s64, 1
        %s503 = smul.addr %s502, 4
        %s504 = scalar_lea.vmem [#allocation2], %s503
        %p505 = pneg %p77
        %p506 = pneg %p74
        %p507 = pneg %p98
        %p508 = pneg %p95
        %p509 = pneg %p119
        %p510 = pneg %p116
        %p511 = pneg %p140
        %p512 = pneg %p137
        %p513 = pneg %p161
        %p514 = pneg %p158
        %p515 = pneg %p182
        %p516 = pneg %p179
        %p517 = pneg %p203
        %p518 = pneg %p200
        %p519 = pneg %p224
        %p520 = pneg %p221
        %p521 = pneg %p245
        %p522 = pneg %p242
        %p523 = pneg %p266
        %p524 = pneg %p263
        %p525 = pneg %p287
        %p526 = pneg %p284
        %p527 = pneg %p308
        %p528 = pneg %p305
        %p529 = pneg %p329
        %p530 = pneg %p326
        %p531 = pneg %p350
        %p532 = pneg %p347
        %p533 = pneg %p376
        %p534 = pneg %p373
        %p535 = scmp.lt.s32.totalorder %s30, 1
        %s536 = scalar_select %p535, %s30, 1
        %s537 = smul.addr %s536, 8
        %s538 = scalar_lea.vmem %s15, %s537
        %s539 = smul.u32 6, %s30
        %p540 = scmp.lt.s32.totalorder %s539, 11
        %s541 = scalar_select %p540, %s539, 11
        %s542 = smul.addr %s541, 4
        %s543 = scalar_lea.vmem %s0, %s542
        %s544 = smul.u32 6, %s30
        %p545 = scmp.lt.s32.totalorder %s30, 1
        %s546 = scalar_select %p545, %s30, 1
        %s547 = smul.addr %s546, 8
        %s548 = scalar_lea.vmem %s15, %s547
        %v550 = vld [vmem:[%s482] sm:$0xf]
        %v551 = vld [vmem:[%s4] sm:$0xf]
        %v552 = vld [vmem:[%s4 + $0x4] sm:$0xf]
        %v553 = vld [vmem:[%s4 + $0x8] sm:$0xf]
        %v554 = vld [vmem:[%s4 + $0xc] sm:$0xf]
        %v555 = vld [vmem:[#allocation4] sm:$0x1]
        %v557 = vperm.slane %v555, 0
        %v563 = vunpack.c.l.b16 %v551
        %v564 = vunpack.c.l.b16 %v552
        %v565 = vunpack.c.l.b16 %v553
        %v566 = vunpack.c.l.b16 %v554
        %v567 = vpack.c.b16 %v564, %v563
        %v568 = vpack.c.b16 %v566, %v565
        %vm571 = vcmask 261120
        %v573 = vsel %vm571, %v550, 0
        %575 = vmatpush.bf16.msra.mxu0 0
        %576 = vmatpush.bf16.msra.mxu0 0
        %577 = vmatpush.bf16.msra.mxu0 0
        %578 = vmatpush.bf16.msra.mxu0 0
        %579 = vmatpush.bf16.msra.mxu0 0
        %580 = vmatpush.bf16.msra.mxu0 0
        %581 = vmatpush.bf16.msra.mxu0 %v568
        %582 = vmatpush.bf16.msra.mxu0 %v567
        %583 = vmatmul.bf16.gmra.mxu0 %v573
        %v584 = vpop.f32.mrf.mxu0
        %v585 = vadd.f32 %v557, %v584
        %v586 = vpop.f32.mrf.mxu0
        %587 = vdwg.mxu0
        %v588 = vld [vmem:[%s543] sm:$0xf]
        %v589 = vld [vmem:[%s543 + $0x4] sm:$0xf]
        %v590 = vld [vmem:[%s543 + $0x8] sm:$0xf]
        %v591 = vld [vmem:[%s543 + $0xc] sm:$0xf]
        %v592 = vld [vmem:[%s543 + $0x10] sm:$0xf]
        %v593 = vld [vmem:[%s543 + $0x14] sm:$0xf]
        %v594 = vld [vmem:[%s2] sm:$0xf]
        %v595 = vld [vmem:[%s2 + $0x4] sm:$0xf]
        %v596 = vld [vmem:[%s2 + $0x8] sm:$0xf]
        %v597 = vld [vmem:[%s2 + $0xc] sm:$0xf]
        %v598 = vld [vmem:[%s3] sm:$0x1]
        %v600 = vperm.slane %v598, 0
        %v608 = vunpack.c.l.b16 %v588
        %v609 = vunpack.c.l.b16 %v589
        %v610 = vunpack.c.l.b16 %v590
        %v611 = vunpack.c.l.b16 %v591
        %v612 = vunpack.c.l.b16 %v592
        %v613 = vunpack.c.l.b16 %v593
        %v614 = vpack.c.b16 %v609, %v608
        %v615 = vpack.c.b16 %v611, %v610
        %v616 = vpack.c.b16 %v613, %v612
        %v621 = vunpack.c.l.b16 %v594
        %v622 = vunpack.c.l.b16 %v595
        %v623 = vunpack.c.l.b16 %v596
        %v624 = vunpack.c.l.b16 %v597
        %v625 = vpack.c.b16 %v622, %v621
        %v626 = vpack.c.b16 %v624, %v623
        %v630 = vsel %vm571, %v614, 0
        %v633 = vsel %vm571, %v615, 0
        %v636 = vsel %vm571, %v616, 0
        %638 = vmatpush.bf16.msra.mxu0 0
        %639 = vmatpush.bf16.msra.mxu0 0
        %640 = vmatpush.bf16.msra.mxu0 0
        %641 = vmatpush.bf16.msra.mxu0 0
        %642 = vmatpush.bf16.msra.mxu0 0
        %643 = vmatpush.bf16.msra.mxu0 0
        %644 = vmatpush.bf16.msra.mxu0 %v626
        %645 = vmatpush.bf16.msra.mxu0 %v625
        %646 = vmatmul.bf16.gmra.mxu0 %v630
        %v647 = vpop.f32.mrf.mxu0
        %v648 = vadd.f32 %v600, %v647
        %v649 = vpop.f32.mrf.mxu0
        %v650 = vadd.f32 %v600, %v649
        %651 = vmatmul.bf16.gmra.mxu0 %v633
        %v652 = vpop.f32.mrf.mxu0
        %v653 = vadd.f32 %v600, %v652
        %v654 = vpop.f32.mrf.mxu0
        %v655 = vadd.f32 %v600, %v654
        %656 = vmatmul.bf16.gmra.mxu0 %v636
        %v657 = vpop.f32.mrf.mxu0
        %v658 = vadd.f32 %v600, %v657
        %v659 = vpop.f32.mrf.mxu0
        %v660 = vadd.f32 %v600, %v659
        %661 = vdwg.mxu0
        %v662 = vmul.f32 %v648, %v585
        %v663 = vmul.f32 %v650, %v585
        %v664 = vmul.f32 %v653, %v585
        %v665 = vmul.f32 %v655, %v585
        %v666 = vmul.f32 %v658, %v585
        %v667 = vmul.f32 %v660, %v585
        %v668 = vpack.c.bf16 %v663, %v662
        %v669 = vpack.c.bf16 %v665, %v664
        %v670 = vpack.c.bf16 %v667, %v666
        %v671 = vld [vmem:[%s8] sm:$0xf]
        %v672 = vld [vmem:[%s8 + $0x4] sm:$0xf]
        %v673 = vld [vmem:[%s8 + $0x8] sm:$0xf]
        %v674 = vld [vmem:[%s8 + $0xc] sm:$0xf]
        %v679 = vunpack.c.l.b16 %v671
        %v680 = vunpack.c.l.b16 %v672
        %v681 = vunpack.c.l.b16 %v673
        %v682 = vunpack.c.l.b16 %v674
        %v683 = vpack.c.b16 %v680, %v679
        %v684 = vpack.c.b16 %v682, %v681
        %v688 = vsel %vm571, %v668, 0
        %v691 = vsel %vm571, %v669, 0
        %v694 = vsel %vm571, %v670, 0
        %696 = vmatpush.bf16.msra.mxu0 0
        %697 = vmatpush.bf16.msra.mxu0 0
        %698 = vmatpush.bf16.msra.mxu0 0
        %699 = vmatpush.bf16.msra.mxu0 0
        %700 = vmatpush.bf16.msra.mxu0 0
        %701 = vmatpush.bf16.msra.mxu0 0
        %702 = vmatpush.bf16.msra.mxu0 %v684
        %703 = vmatpush.bf16.msra.mxu0 %v683
        %704 = vmatmul.bf16.gmra.mxu0 %v688
        %v705 = vpop.f32.mrf.mxu0
        %v706 = vadd.f32 0.0, %v705
        %v707 = vpop.f32.mrf.mxu0
        %v708 = vadd.f32 0.0, %v707
        %709 = vmatmul.bf16.gmra.mxu0 %v691
        %v710 = vpop.f32.mrf.mxu0
        %v711 = vadd.f32 0.0, %v710
        %v712 = vpop.f32.mrf.mxu0
        %v713 = vadd.f32 0.0, %v712
        %714 = vmatmul.bf16.gmra.mxu0 %v694
        %v715 = vpop.f32.mrf.mxu0
        %v716 = vadd.f32 0.0, %v715
        %v717 = vpop.f32.mrf.mxu0
        %v718 = vadd.f32 0.0, %v717
        %719 = vdwg.mxu0
        %vm720 = vcmask 31744
        %v721 = vsel %vm720, %v706, -inf
        %v722 = vsel %vm720, %v708, -inf
        %v723 = vsel %vm720, %v711, -inf
        %v724 = vsel %vm720, %v713, -inf
        %v725 = vsel %vm720, %v716, -inf
        %v726 = vmax.f32 %v721, %v725
        %v727 = vsel %vm720, %v718, -inf
        %v728 = vmax.f32 %v722, %v727
        %v729 = vmax.f32 %v726, %v728
        %v730 = vmax.f32 %v723, %v724
        %v731 = vmax.f32 %v729, %v730
        %v732 = vsub.f32 %v706, %v731
        %v733 = vsub.f32 %v708, %v731
        %v734 = vsub.f32 %v711, %v731
        %v735 = vsub.f32 %v713, %v731
        %v736 = vsub.f32 %v716, %v731
        %v737 = vsub.f32 %v718, %v731
        %v738 = vmul.f32 %v732, 1.442695
        %v739 = vpow.pop %v738
        %v740 = vmul.f32 %v733, 1.442695
        %v741 = vpow.pop %v740
        %v742 = vmul.f32 %v734, 1.442695
        %v743 = vpow.pop %v742
        %v744 = vmul.f32 %v735, 1.442695
        %v745 = vpow.pop %v744
        %v746 = vmul.f32 %v736, 1.442695
        %v747 = vpow.pop %v746
        %v748 = vmul.f32 %v737, 1.442695
        %v749 = vpow.pop %v748
        %v750 = vsel %vm720, %v739, 0.0
        %v751 = vsel %vm720, %v741, 0.0
        %v752 = vadd.f32 %v750, %v751
        %v753 = vsel %vm720, %v743, 0.0
        %v754 = vadd.f32 %v752, %v753
        %v755 = vsel %vm720, %v745, 0.0
        %v756 = vadd.f32 %v754, %v755
        %v757 = vsel %vm720, %v747, 0.0
        %v758 = vadd.f32 %v756, %v757
        %v759 = vsel %vm720, %v749, 0.0
        %v760 = vadd.f32 %v758, %v759
        %v761 = vrcp.pop %v760
        %v762 = vmul.f32 %v739, %v761
        %v763 = vmul.f32 %v741, %v761
        %v764 = vmul.f32 %v743, %v761
        %v765 = vmul.f32 %v745, %v761
        %v766 = vmul.f32 %v747, %v761
        %v767 = vmul.f32 %v749, %v761
        %v768 = vpack.c.bf16 %v763, %v762
        %v769 = vpack.c.bf16 %v765, %v764
        %v770 = vpack.c.bf16 %v767, %v766
        %v771 = vld [vmem:[%s9] sm:$0x3]
        %v773 = vsel %vm720, %v768, 0
        %v776 = vsel %vm720, %v769, 0
        %v779 = vsel %vm720, %v770, 0
        %vm781 = vcmask 1041408
        %v783 = vsel %vm781, %v771, 0
        %785 = vmatpush.bf16.msra.mxu0 0
        %786 = vmatpush.bf16.msra.mxu0 0
        %787 = vmatpush.bf16.msra.mxu0 0
        %788 = vmatpush.bf16.msra.mxu0 0
        %789 = vmatpush.bf16.msra.mxu0 0
        %790 = vmatpush.bf16.msra.mxu0 0
        %791 = vmatpush.bf16.msra.mxu0 0
        %792 = vmatpush.bf16.msra.mxu0 %v783
        %793 = vmatmul.bf16.gmra.mxu0 %v773
        %v794 = vpop.f32.mrf.mxu0
        %v795 = vadd.f32 0.0, %v794
        %v796 = vpop.f32.mrf.mxu0
        %v797 = vadd.f32 0.0, %v796
        %798 = vmatmul.bf16.gmra.mxu0 %v776
        %v799 = vpop.f32.mrf.mxu0
        %v800 = vadd.f32 0.0, %v799
        %v801 = vpop.f32.mrf.mxu0
        %v802 = vadd.f32 0.0, %v801
        %803 = vmatmul.bf16.gmra.mxu0 %v779
        %v804 = vpop.f32.mrf.mxu0
        %v805 = vadd.f32 0.0, %v804
        %v806 = vpop.f32.mrf.mxu0
        %v807 = vadd.f32 0.0, %v806
        %808 = vdwg.mxu0
        %815 = vrot.lane.b32.xlu0 %v648, 96
        %v816 = vpop.permute.xlu0 %815
        %817 = vrot.lane.b32.xlu0 %v650, 96
        %v818 = vpop.permute.xlu0 %817
        %819 = vrot.lane.b32.xlu0 %v653, 96
        %v820 = vpop.permute.xlu0 %819
        %821 = vrot.lane.b32.xlu0 %v655, 96
        %v822 = vpop.permute.xlu0 %821
        %823 = vrot.lane.b32.xlu0 %v658, 96
        %v824 = vpop.permute.xlu0 %823
        %825 = vrot.lane.b32.xlu0 %v660, 96
        %v826 = vpop.permute.xlu0 %825
        %v833 = vmul.f32 %v795, %v816
        %v834 = vmul.f32 %v797, %v818
        %v835 = vmul.f32 %v800, %v820
        %v836 = vmul.f32 %v802, %v822
        %v837 = vmul.f32 %v805, %v824
        %v838 = vmul.f32 %v807, %v826
        %v839 = vsel %vm571, %v833, 0.0
        %v840 = vsel %vm571, %v834, 0.0
        %v841 = vadd.f32 %v839, %v840
        %v842 = vsel %vm571, %v835, 0.0
        %v843 = vadd.f32 %v841, %v842
        %v844 = vsel %vm571, %v836, 0.0
        %v845 = vadd.f32 %v843, %v844
        %v846 = vsel %vm571, %v837, 0.0
        %v847 = vadd.f32 %v845, %v846
        %v848 = vsel %vm571, %v838, 0.0
        %v849 = vadd.f32 %v847, %v848
        %v850 = vpack.c.bf16 %v849, %v849
        %v851 = vld [vmem:[%s6] sm:$0xf]
        %v852 = vld [vmem:[%s6 + $0x4] sm:$0xf]
        %v853 = vld [vmem:[%s6 + $0x8] sm:$0xf]
        %v854 = vld [vmem:[%s6 + $0xc] sm:$0xf]
        %v855 = vld [vmem:[%s7] sm:$0x1]
        %v856 = vmul.f32 %v855, 6.0
        %v858 = vperm.slane %v856, 0
        %v864 = vunpack.c.l.b16 %v851
        %v865 = vunpack.c.l.b16 %v852
        %v866 = vunpack.c.l.b16 %v853
        %v867 = vunpack.c.l.b16 %v854
        %v868 = vpack.c.b16 %v865, %v864
        %v869 = vpack.c.b16 %v867, %v866
        %v873 = vsel %vm571, %v850, 0
        %875 = vmatpush.bf16.msra.mxu0 0
        %876 = vmatpush.bf16.msra.mxu0 0
        %877 = vmatpush.bf16.msra.mxu0 0
        %878 = vmatpush.bf16.msra.mxu0 0
        %879 = vmatpush.bf16.msra.mxu0 0
        %880 = vmatpush.bf16.msra.mxu0 0
        %881 = vmatpush.bf16.msra.mxu0 %v869
        %882 = vmatpush.bf16.msra.mxu0 %v868
        %883 = vmatmul.bf16.gmra.mxu0 %v873
        %v884 = vpop.f32.mrf.mxu0
        %v885 = vadd.f32 %v858, %v884
        %v886 = vpop.f32.mrf.mxu0
        %887 = vdwg.mxu0
        %v888 = vpack.c.bf16 %v885, %v885
        %v889 = vld [vmem:[%s10] sm:$0xf]
        %v890 = vld [vmem:[%s10 + $0x4] sm:$0xf]
        %v891 = vld [vmem:[%s10 + $0x8] sm:$0xf]
        %v892 = vld [vmem:[%s10 + $0xc] sm:$0xf]
        %v893 = vld [vmem:[%s11] sm:$0xf]
        %v894 = vld [vmem:[%s11 + $0x4] sm:$0xf]
        %v895 = vld [vmem:[%s11 + $0x8] sm:$0xf]
        %v896 = vld [vmem:[%s11 + $0xc] sm:$0xf]
        %v901 = vunpack.c.l.b16 %v893
        %v902 = vunpack.c.l.b16 %v894
        %v903 = vunpack.c.l.b16 %v895
        %v904 = vunpack.c.l.b16 %v896
        %v905 = vpack.c.b16 %v902, %v901
        %v906 = vpack.c.b16 %v904, %v903
        %909 = vmatpush.bf16.msra.mxu0 0
        %910 = vmatpush.bf16.msra.mxu0 0
        %911 = vmatpush.bf16.msra.mxu0 0
        %912 = vmatpush.bf16.msra.mxu0 0
        %913 = vmatpush.bf16.msra.mxu0 0
        %914 = vmatpush.bf16.msra.mxu0 0
        %915 = vmatpush.bf16.msra.mxu0 %v906
        %916 = vmatpush.bf16.msra.mxu0 %v905
        %917 = vmatmul.bf16.gmra.mxu0 %v573
        %v918 = vpop.f32.mrf.mxu0
        %v919 = vadd.f32 0.0, %v918
        %v920 = vpop.f32.mrf.mxu0
        %921 = vdwg.mxu0
        %v926 = vunpack.c.l.b16 %v889
        %v927 = vunpack.c.l.b16 %v890
        %v928 = vunpack.c.l.b16 %v891
        %v929 = vunpack.c.l.b16 %v892
        %v930 = vpack.c.b16 %v927, %v926
        %v931 = vpack.c.b16 %v929, %v928
        %v935 = vsel %vm571, %v888, 0
        %937 = vmatpush.bf16.msra.mxu0 0
        %938 = vmatpush.bf16.msra.mxu0 0
        %939 = vmatpush.bf16.msra.mxu0 0
        %940 = vmatpush.bf16.msra.mxu0 0
        %941 = vmatpush.bf16.msra.mxu0 0
        %942 = vmatpush.bf16.msra.mxu0 0
        %943 = vmatpush.bf16.msra.mxu0 %v931
        %944 = vmatpush.bf16.msra.mxu0 %v930
        %945 = vmatmul.bf16.gmra.mxu0 %v935
        %v946 = vpop.f32.mrf.mxu0
        %v947 = vadd.f32 %v919, %v946
        %v948 = vpop.f32.mrf.mxu0
        %949 = vdwg.mxu0
        %v950 = vld [vmem:[%s12] sm:$0x1]
        %v952 = vperm.slane %v950, 0
        %v954 = vadd.f32 %v947, %v952
        %v955 = vmax.f32 %v954, 0.0
        %v956 = vpack.c.bf16 %v955, %v955
        %v957 = vld [vmem:[%s13] sm:$0xf]
        %v958 = vld [vmem:[%s13 + $0x4] sm:$0xf]
        %v959 = vld [vmem:[%s13 + $0x8] sm:$0xf]
        %v960 = vld [vmem:[%s13 + $0xc] sm:$0xf]
        %v961 = vld [vmem:[%s14] sm:$0x1]
        %v963 = vperm.slane %v961, 0
        %v969 = vunpack.c.l.b16 %v957
        %v970 = vunpack.c.l.b16 %v958
        %v971 = vunpack.c.l.b16 %v959
        %v972 = vunpack.c.l.b16 %v960
        %v973 = vpack.c.b16 %v970, %v969
        %v974 = vpack.c.b16 %v972, %v971
        %v978 = vsel %vm571, %v956, 0
        %980 = vmatpush.bf16.msra.mxu0 0
        %981 = vmatpush.bf16.msra.mxu0 0
        %982 = vmatpush.bf16.msra.mxu0 0
        %983 = vmatpush.bf16.msra.mxu0 0
        %984 = vmatpush.bf16.msra.mxu0 0
        %985 = vmatpush.bf16.msra.mxu0 0
        %986 = vmatpush.bf16.msra.mxu0 %v974
        %987 = vmatpush.bf16.msra.mxu0 %v973
        %988 = vmatmul.bf16.gmra.mxu0 %v978
        %v989 = vpop.f32.mrf.mxu0
        %v990 = vadd.f32 %v963, %v989
        %v991 = vpop.f32.mrf.mxu0
        %992 = vdwg.mxu0
        %vm993 = vcmask 15360
        %v994 = vsel %vm993, %v990, -inf
        %995 = vmax.xlane.f32.xlu0 %v994
        %v996 = vpop.xlane.xlu0 %995
        %v997 = vsub.f32 %v990, %v996
        %v998 = vmul.f32 %v997, 1.442695
        %v999 = vpow.pop %v998
        %v1000 = vsel %vm993, %v999, 0.0
        %1001 = vadd.xlane.f32.xlu0 %v1000
        %v1002 = vpop.xlane.xlu0 %1001
        %v1003 = vrcp.pop %v1002
        %v1004 = vmul.f32 %v1002, %v1003
        %v1005 = vsub.f32 1.0, %v1004
        %v1006 = vmul.f32 %v1003, %v1005
        %v1007 = vadd.f32 %v1003, %v1006
        %vm1008 = vweird.f32 %v1002
        %vm1009 = vweird.f32 %v1003
        %vm1010 = vmor %vm1008, %vm1009
        %v1011 = vsel %vm1010, %v1003, %v1007
        %v1012 = vand.u32 2147483647, %v1002
        %vm1013 = vcmp.eq.f32.partialorder %v1012, 8.507059e+37
        %v1014 = vand.u32 %v1002, 2147483648
        %v1015 = vor.u32 1.1754944e-38, %v1014
        %v1016 = vsel %vm1013, %v1015, %v1011
        %v1017 = vmul.f32 %v999, %v1016
        %1018 = vst.msk [vmem:[%s548] sm:$0xff] %vm993, %v1017
        %p1019 = scmp.lt.s32.totalorder %s30, 1
        %s1020 = scalar_select %p1019, %s30, 1
        %s1021 = smul.addr %s1020, 8
        %s1022 = scalar_lea.vmem %s15, %s1021
        // Predicated region
        $region89: #{tpu_custom_call.1} parent=79 // pred_check
          %p1023 = pneg %p373
        $region90: #{tpu_custom_call.1} parent=79 // pred_check_branch
          %1025 = sbr.rel (%p1023) target = $region92
        $region91: #{tpu_custom_call.1} parent=79 // pred_region
          _
        $region92: #{tpu_custom_call.1} parent=79 // pred_fallthru
          _
      $region80: #{tpu_custom_call.1} parent=5 // pred_fallthru
        _
      %p1026 = scmp.le.s32.totalorder 2, %s25
      // Predicated region
      $region93: #{tpu_custom_call.1} parent=5 // pred_check
        %p1027 = pneg %p1026
      $region94: #{tpu_custom_call.1} parent=5 // pred_check_branch
        %1029 = sbr.rel (%p1027) target = $region96
      $region95: #{tpu_custom_call.1} parent=5 // pred_region
        %s1030 = ssub.s32 %s25, 2
        // Predicated region
        $region97: #{tpu_custom_call.1} parent=95 // pred_check
          %p1031 = pneg %p379
        $region98: #{tpu_custom_call.1} parent=95 // pred_check_branch
          %1033 = sbr.rel (%p1031) target = $region100
        $region99: #{tpu_custom_call.1} parent=95 // pred_region
          %p1034 = scmp.lt.s32.totalorder %s31, 1
          %s1035 = scalar_select %p1034, %s31, 1
          %s1036 = smul.addr %s1035, 8
          %s1037 = scalar_lea.vmem %s15, %s1036
        $region100: #{tpu_custom_call.1} parent=95 // pred_fallthru
          _
      $region96: #{tpu_custom_call.1} parent=5 // pred_fallthru
        _
    $region6: #{tpu_custom_call.1} parent=1 // loop_footer
      %s29 = sadd.s32 1, %s25
    $region7: #{tpu_custom_call.1} parent=1 // loop_footer_branch
      %24 = sbr.rel target = $region3
    $region8: #{tpu_custom_call.1} parent=1 // loop_exit
      _
    %1038 = vsyncpa [#allocation3], 1
    %s1039 = scalar_lea.sflag [#allocation3], 1
    %1040 = vsyncpa %s1039, 1
    %1041 = vsyncpa [#allocation5], 1

</llo_original>
